<compile_context>
chip_gen: v5e
topology: v5e:2x2
jax: 0.10.0
libtpu: 0.0.40
codegen_flags: <defaults>
</compile_context>

<pallas_src>
import functools

import jax
import jax.numpy as jnp
from jax.experimental import pallas as pl
from jax.experimental.pallas import tpu as pltpu


def _round_up(x, n):
    return ((x + n - 1) // n) * n


def _circle_loss_kernel(x_ref, packed_ref, part_ref, acc_ref, *,
                        m, gamma, n_rows, tile_rows, two_axes, fold_gamma):
    if two_axes:
        p = pl.program_id(0)          # partial / core index   (parallel or core_parallel)
        t = pl.program_id(1)          # row-tile index         (arbitrary, reduction)
        T = pl.num_programs(1)
    else:
        p = 0
        t = pl.program_id(0)
        T = pl.num_programs(0)

    @pl.when(t == 0)
    def _():
        acc_ref[...] = jnp.zeros_like(acc_ref)

    x = x_ref[...].astype(jnp.float32)            # (TM, C) f32 math regardless of input dtype
    packed = packed_ref[...]                      # (TM, 1) int32: label*2 + member
    lbl = packed >> 1                             # (TM, 1) CE target per row
    mem = (packed & 1) > 0                        # (TM, 1) bool: row index appears in `label`

    # Per-row scalars (broadcast over C) -> avoids full (TM, C) selects:
    #   member rows : a = relu(1 + m - x), sigma = 1 - m
    #   other rows  : a = relu(x + m),     sigma = m
    s = jnp.where(mem, -1.0, 1.0)                 # (TM, 1)
    c = jnp.where(mem, 1.0 + m, m)                # (TM, 1)
    sig = jnp.where(mem, 1.0 - m, m)              # (TM, 1)

    if fold_gamma:
        # gamma > 0  =>  gamma * relu(u) == relu(gamma * u); fold gamma into the
        # per-row affine so z needs one fewer full-width multiply.
        a = jnp.maximum(x * (s * gamma) + (c * gamma), 0.0)   # (TM, C), already *gamma
        z = a * (x - sig)
    else:
        a = jnp.maximum(x * s + c, 0.0)
        z = a * (x - sig) * gamma

    # Numerically stable cross entropy: loss_i = logsumexp(z_i) - z_i[label_i]
    zmax = jnp.max(z, axis=-1, keepdims=True)
    lse = zmax + jnp.log(jnp.sum(jnp.exp(z - zmax), axis=-1, keepdims=True))
    col = jax.lax.broadcasted_iota(jnp.int32, z.shape, 1)
    z_tgt = jnp.sum(jnp.where(col == lbl, z, 0.0), axis=-1, keepdims=True)
    row_loss = lse - z_tgt                        # (TM, 1)

    # Padded rows (global row id >= n_rows) must contribute 0.  Only the tiles
    # that actually straddle/exceed the boundary pay the iota+cmp+select.
    row0 = (p * T + t) * tile_rows
    has_pad = row0 + tile_rows > n_rows

    @pl.when(has_pad)
    def _():
        rid = row0 + jax.lax.broadcasted_iota(jnp.int32, (tile_rows, 1), 0)
        acc_ref[...] += jnp.where(rid < n_rows, row_loss, 0.0)

    @pl.when(jnp.logical_not(has_pad))
    def _():
        acc_ref[...] += row_loss

    @pl.when(t == T - 1)
    def _():
        # Single cross-sublane reduce per partial, not per step.
        part_ref[...] = jnp.zeros_like(part_ref) + jnp.sum(acc_ref[...])


def circle_loss(inp, label, *, m=0.25, gamma=16.0,
                num_partials=1, core_parallel=False, x_buffer_count=2,
                input_dtype=None,
                target_block_bytes=4 * 1024 * 1024,
                vmem_limit_bytes=32 * 1024 * 1024):
    """Forward pass of the PyTorch CircleLoss module (mean CE reduction).

    inp:   (N, C) float logits / similarities (f32 or bf16).
    label: (N,)   int class indices; must satisfy 0 <= label < min(N, C)
           (as in PyTorch; out-of-range values are silently dropped here).
    input_dtype: set to jnp.bfloat16 to halve HBM read traffic (math stays f32).
    num_partials / core_parallel: leave (1, False) on v5e/v6e; use (2, True) on
           v7x so the two TensorCores each reduce half the rows.
    x_buffer_count: >2 enables deeper pipelining of the logits stream (v7x).
    """
    N, C = inp.shape
    label = label.astype(jnp.int32)

    if input_dtype is not None:
        inp = inp.astype(input_dtype)

    # Cheap O(N) metadata preprocessing: member[r] == 1 iff r appears in `label`,
    # i.e. exactly the rows the PyTorch advanced indexing a[label] = ... overwrites
    # (duplicate labels write identical rows, so write order is irrelevant).
    member = jnp.zeros((N,), jnp.int32).at[label].set(1)
    packed = (label * 2 + member).reshape(-1, 1)          # one int32 side stream

    # ---- tiling: big (~4 MiB) row blocks; class axis stays on lanes (no transpose).
    itemsize = jnp.dtype(inp.dtype).itemsize
    lane_c = _round_up(max(C, 128), 128)                  # lane-padded class width
    rows_per_part = pl.cdiv(N, num_partials)

    tm = max(8, target_block_bytes // (itemsize * lane_c))
    tm = min(tm, 2048 if C <= 512 else 4096)              # cap per-row temp pressure
    tm = min(tm, _round_up(rows_per_part, 8))
    tm = _round_up(tm, 8)

    def _vmem_bytes(tm_):
        return (max(2, x_buffer_count) * tm_ * lane_c * itemsize   # logits (multi-buffered)
                + 2 * tm_ * 128 * 4                                # packed labels (lane-padded)
                + tm_ * 128 * 4                                    # accumulator scratch
                + 3 * tm_ * lane_c * 4)                            # f32 intermediates headroom

    while tm > 8 and _vmem_bytes(tm) > (vmem_limit_bytes * 3) // 4:
        tm = _round_up(max(8, tm // 2), 8)
    # (For extreme C even tm=8 may exceed the budget; we then rely on vmem_limit_bytes.)

    tiles_per_part = pl.cdiv(rows_per_part, tm)
    r_pad = num_partials * tiles_per_part * tm

    x = inp
    pk = packed
    if r_pad != N:
        x = jnp.pad(x, ((0, r_pad - N), (0, 0)))
        pk = jnp.pad(pk, ((0, r_pad - N), (0, 0)))

    two_axes = num_partials > 1
    kernel = functools.partial(
        _circle_loss_kernel, m=float(m), gamma=float(gamma), n_rows=N,
        tile_rows=tm, two_axes=two_axes, fold_gamma=(float(gamma) > 0.0))

    x_spec_kwargs = {} if x_buffer_count == 2 else {"pipeline_mode": pl.Buffered(x_buffer_count)}
    T = tiles_per_part

    if two_axes:
        grid = (num_partials, T)
        in_specs = [
            pl.BlockSpec((tm, C), lambda p_, t_: (p_ * T + t_, 0), **x_spec_kwargs),
            pl.BlockSpec((tm, 1), lambda p_, t_: (p_ * T + t_, 0)),
        ]
        out_specs = pl.BlockSpec((1, 1, 1), lambda p_, t_: (p_, 0, 0))
        lead = pltpu.CORE_PARALLEL if core_parallel else pltpu.PARALLEL
        dim_sem = (lead, pltpu.ARBITRARY)
    else:
        grid = (T,)
        in_specs = [
            pl.BlockSpec((tm, C), lambda t_: (t_, 0), **x_spec_kwargs),
            pl.BlockSpec((tm, 1), lambda t_: (t_, 0)),
        ]
        out_specs = pl.BlockSpec((1, 1, 1), lambda t_: (0, 0, 0))
        dim_sem = (pltpu.ARBITRARY,)

    partials = pl.pallas_call(
        kernel,
        out_shape=jax.ShapeDtypeStruct((num_partials, 1, 1), jnp.float32),
        grid_spec=pltpu.PrefetchScalarGridSpec(
            num_scalar_prefetch=0,
            grid=grid,
            in_specs=in_specs,
            out_specs=out_specs,
            scratch_shapes=[pltpu.VMEM((tm, 1), jnp.float32)],
        ),
        compiler_params=pltpu.CompilerParams(
            dimension_semantics=dim_sem,
            vmem_limit_bytes=vmem_limit_bytes),
    )(x, pk)

    # Final mean over all N samples (scalar op in plain JAX).
    return jnp.sum(partials) / N


def _reference(inp, label, m, gamma):
    """Literal JAX translation of CircleLoss.forward (forward values only)."""
    a = jnp.maximum(inp + m, 0.0)
    a = a.at[label].set(jnp.maximum(-inp[label] + 1.0 + m, 0.0))
    sigma = jnp.ones_like(inp) * m
    sigma = sigma.at[label].set(1.0 - m)
    z = a * (inp - sigma) * gamma
    logs = jax.nn.log_softmax(z, axis=-1)
    nll = -jnp.take_along_axis(logs, label[:, None], axis=-1)[:, 0]
    return jnp.mean(nll)


if __name__ == "__main__":
    key = jax.random.PRNGKey(0)
    k1, k2, k3, k4 = jax.random.split(key, 4)

    m, gamma = 0.25, 16.0

    # --- case 1: small demo shapes, f32 path -------------------------------
    N, C = 8, 32
    inp = jax.random.normal(k1, (N, C), dtype=jnp.float32)
    # label values must be < N (PyTorch a[label] row indexing) and < C (CE target)
    label = jax.random.randint(k2, (N,), 0, min(N, C), dtype=jnp.int32)

    out = jax.block_until_ready(circle_loss(inp, label, m=m, gamma=gamma))
    ref = _reference(inp, label, m, gamma)
    assert jnp.allclose(out, ref, rtol=1e-4, atol=1e-4), (out, ref)

    # --- case 2: bf16 input stream (compare vs reference on the same quantized
    # inputs; the delta vs f32 is input quantization, not kernel math) ------
    out_bf16 = jax.block_until_ready(
        circle_loss(inp, label, m=m, gamma=gamma, input_dtype=jnp.bfloat16))
    ref_bf16 = _reference(inp.astype(jnp.bfloat16).astype(jnp.float32), label, m, gamma)
    assert jnp.allclose(out_bf16, ref_bf16, rtol=1e-3, atol=1e-3), (out_bf16, ref_bf16)

    # --- case 3: row count not a multiple of the tile -> exercises the
    # pl.when-gated padded-row mask ------------------------------------------
    N2 = 13
    inp2 = jax.random.normal(k3, (N2, C), dtype=jnp.float32)
    label2 = jax.random.randint(k4, (N2,), 0, min(N2, C), dtype=jnp.int32)
    out2 = jax.block_until_ready(circle_loss(inp2, label2, m=m, gamma=gamma))
    ref2 = _reference(inp2, label2, m, gamma)
    assert jnp.allclose(out2, ref2, rtol=1e-4, atol=1e-4), (out2, ref2)

    print("KERNEL_OK")
</pallas_src>

<mosaic_0001>
module attributes {stable_mosaic.version = 11 : i64} {
  func.func @_circle_loss_kernel(%arg0: i32, %arg1: memref<8x32xf32, #tpu.memory_space<vmem>>, %arg2: memref<8x1xi32, #tpu.memory_space<vmem>>, %arg3: memref<1x1x1xf32, #tpu.memory_space<vmem>>, %arg4: memref<8x1xf32, #tpu.memory_space<vmem>>) attributes {dimension_semantics = [#tpu.dimension_semantics<arbitrary>], iteration_bounds = array<i64: 1>, scalar_prefetch = 0 : i64, scratch_operands = 1 : i64, tpu.core_type = #tpu.core_type<tc>, window_params = [{transform_indices = @transform_0, window_bounds = array<i64: 8, 32>}, {transform_indices = @transform_1, window_bounds = array<i64: 8, 1>}, {pipeline_mode = #tpu.pipeline_mode<synchronous>, transform_indices = @transform_2, window_bounds = array<i64: 1, 1, 1>}]} {
    %c0_i32 = arith.constant 0 : i32
    %0 = arith.cmpi eq, %arg0, %c0_i32 : i32
    %1 = arith.extui %0 : i1 to i32
    %c0_i32_0 = arith.constant 0 : i32
    %2 = arith.cmpi ne, %1, %c0_i32_0 : i32
    scf.if %2 {
      %cst_25 = arith.constant 0.000000e+00 : f32
      %62 = vector.broadcast %cst_25 : f32 to vector<8x1xf32>
      %c0_26 = arith.constant 0 : index
      %c0_27 = arith.constant 0 : index
      %63 = vector.load %arg4[%c0_26, %c0_27] : memref<8x1xf32, #tpu.memory_space<vmem>>, vector<8x1xf32>
      tpu.vector_store %arg4[%c0_26, %c0_27], %62 {strides = array<i32>} : memref<8x1xf32, #tpu.memory_space<vmem>>, vector<8x1xf32>,
    } else {
    }
    %c0 = arith.constant 0 : index
    %c0_1 = arith.constant 0 : index
    %3 = vector.load %arg1[%c0, %c0_1] : memref<8x32xf32, #tpu.memory_space<vmem>>, vector<8x32xf32>
    %c0_2 = arith.constant 0 : index
    %c0_3 = arith.constant 0 : index
    %4 = vector.load %arg2[%c0_2, %c0_3] : memref<8x1xi32, #tpu.memory_space<vmem>>, vector<8x1xi32>
    %c1_i32 = arith.constant 1 : i32
    %5 = vector.broadcast %c1_i32 : i32 to vector<8x1xi32>
    %6 = arith.shrsi %4, %5 : vector<8x1xi32>
    %c1_i32_4 = arith.constant 1 : i32
    %7 = vector.broadcast %c1_i32_4 : i32 to vector<8x1xi32>
    %8 = arith.andi %4, %7 : vector<8x1xi32>
    %c0_i32_5 = arith.constant 0 : i32
    %9 = vector.broadcast %c0_i32_5 : i32 to vector<8x1xi32>
    %10 = arith.cmpi sgt, %8, %9 : vector<8x1xi32>
    %cst = arith.constant -1.000000e+00 : f32
    %cst_6 = arith.constant 1.000000e+00 : f32
    %11 = vector.broadcast %cst : f32 to vector<8x1xf32>
    %12 = vector.broadcast %cst_6 : f32 to vector<8x1xf32>
    %13 = arith.select %10, %11, %12 : vector<8x1xi1>, vector<8x1xf32>
    %cst_7 = arith.constant 1.250000e+00 : f32
    %cst_8 = arith.constant 2.500000e-01 : f32
    %14 = vector.broadcast %cst_7 : f32 to vector<8x1xf32>
    %15 = vector.broadcast %cst_8 : f32 to vector<8x1xf32>
    %16 = arith.select %10, %14, %15 : vector<8x1xi1>, vector<8x1xf32>
    %cst_9 = arith.constant 7.500000e-01 : f32
    %cst_10 = arith.constant 2.500000e-01 : f32
    %17 = vector.broadcast %cst_9 : f32 to vector<8x1xf32>
    %18 = vector.broadcast %cst_10 : f32 to vector<8x1xf32>
    %19 = arith.select %10, %17, %18 : vector<8x1xi1>, vector<8x1xf32>
    %cst_11 = arith.constant 1.600000e+01 : f32
    %20 = vector.broadcast %cst_11 : f32 to vector<8x1xf32>
    %21 = arith.mulf %13, %20 : vector<8x1xf32>
    %22 = vector.broadcast %21 : vector<8x1xf32> to vector<8x32xf32>
    %23 = arith.mulf %3, %22 : vector<8x32xf32>
    %cst_12 = arith.constant 1.600000e+01 : f32
    %24 = vector.broadcast %cst_12 : f32 to vector<8x1xf32>
    %25 = arith.mulf %16, %24 : vector<8x1xf32>
    %26 = vector.broadcast %25 : vector<8x1xf32> to vector<8x32xf32>
    %27 = arith.addf %23, %26 : vector<8x32xf32>
    %cst_13 = arith.constant 0.000000e+00 : f32
    %28 = vector.broadcast %cst_13 : f32 to vector<8x32xf32>
    %29 = arith.maximumf %27, %28 : vector<8x32xf32>
    %30 = vector.broadcast %19 : vector<8x1xf32> to vector<8x32xf32>
    %31 = arith.subf %3, %30 : vector<8x32xf32>
    %32 = arith.mulf %29, %31 : vector<8x32xf32>
    %cst_14 = arith.constant dense<0xFF800000> : vector<8xf32>
    %33 = vector.multi_reduction <maximumf>, %32, %cst_14 [1] : vector<8x32xf32> to vector<8xf32>
    %34 = vector.shape_cast %33 : vector<8xf32> to vector<8x1xf32>
    %35 = vector.broadcast %34 : vector<8x1xf32> to vector<8x32xf32>
    %36 = arith.subf %32, %35 : vector<8x32xf32>
    %37 = math.exp %36 : vector<8x32xf32>
    %cst_15 = arith.constant dense<0.000000e+00> : vector<8xf32>
    %38 = vector.multi_reduction <add>, %37, %cst_15 [1] : vector<8x32xf32> to vector<8xf32>
    %39 = vector.shape_cast %38 : vector<8xf32> to vector<8x1xf32>
    %40 = math.log %39 : vector<8x1xf32>
    %41 = arith.addf %34, %40 : vector<8x1xf32>
    %42 = tpu.iota {dimensions = array<i32: 1>} : vector<8x32xi32>
    %43 = vector.broadcast %6 : vector<8x1xi32> to vector<8x32xi32>
    %44 = arith.cmpi eq, %42, %43 : vector<8x32xi32>
    %cst_16 = arith.constant 0.000000e+00 : f32
    %45 = vector.broadcast %cst_16 : f32 to vector<8x32xf32>
    %46 = arith.select %44, %32, %45 : vector<8x32xi1>, vector<8x32xf32>
    %cst_17 = arith.constant dense<0.000000e+00> : vector<8xf32>
    %47 = vector.multi_reduction <add>, %46, %cst_17 [1] : vector<8x32xf32> to vector<8xf32>
    %48 = vector.shape_cast %47 : vector<8xf32> to vector<8x1xf32>
    %49 = arith.subf %41, %48 : vector<8x1xf32>
    %c0_i32_18 = arith.constant 0 : i32
    %50 = arith.addi %c0_i32_18, %arg0 : i32
    %c8_i32 = arith.constant 8 : i32
    %51 = arith.muli %50, %c8_i32 : i32
    %c8_i32_19 = arith.constant 8 : i32
    %52 = arith.addi %51, %c8_i32_19 : i32
    %c8_i32_20 = arith.constant 8 : i32
    %53 = arith.cmpi sgt, %52, %c8_i32_20 : i32
    %54 = arith.extui %53 : i1 to i32
    %c0_i32_21 = arith.constant 0 : i32
    %55 = arith.cmpi ne, %54, %c0_i32_21 : i32
    scf.if %55 {
      %62 = tpu.iota {dimensions = array<i32: 0>} : vector<8x1xi32>
      %63 = vector.broadcast %51 : i32 to vector<8x1xi32>
      %64 = arith.addi %63, %62 : vector<8x1xi32>
      %c0_25 = arith.constant 0 : index
      %c0_26 = arith.constant 0 : index
      %65 = vector.load %arg4[%c0_25, %c0_26] : memref<8x1xf32, #tpu.memory_space<vmem>>, vector<8x1xf32>
      %c8_i32_27 = arith.constant 8 : i32
      %66 = vector.broadcast %c8_i32_27 : i32 to vector<8x1xi32>
      %67 = arith.cmpi slt, %64, %66 : vector<8x1xi32>
      %cst_28 = arith.constant 0.000000e+00 : f32
      %68 = vector.broadcast %cst_28 : f32 to vector<8x1xf32>
      %69 = arith.select %67, %49, %68 : vector<8x1xi1>, vector<8x1xf32>
      %70 = arith.addf %65, %69 : vector<8x1xf32>
      %c0_29 = arith.constant 0 : index
      %c0_30 = arith.constant 0 : index
      %71 = vector.load %arg4[%c0_29, %c0_30] : memref<8x1xf32, #tpu.memory_space<vmem>>, vector<8x1xf32>
      tpu.vector_store %arg4[%c0_29, %c0_30], %70 {strides = array<i32>} : memref<8x1xf32, #tpu.memory_space<vmem>>, vector<8x1xf32>,
    } else {
    }
    %true = arith.constant true
    %56 = arith.xori %53, %true : i1
    %57 = arith.extui %56 : i1 to i32
    %c0_i32_22 = arith.constant 0 : i32
    %58 = arith.cmpi ne, %57, %c0_i32_22 : i32
    scf.if %58 {
      %c0_25 = arith.constant 0 : index
      %c0_26 = arith.constant 0 : index
      %62 = vector.load %arg4[%c0_25, %c0_26] : memref<8x1xf32, #tpu.memory_space<vmem>>, vector<8x1xf32>
      %63 = arith.addf %62, %49 : vector<8x1xf32>
      %c0_27 = arith.constant 0 : index
      %c0_28 = arith.constant 0 : index
      %64 = vector.load %arg4[%c0_27, %c0_28] : memref<8x1xf32, #tpu.memory_space<vmem>>, vector<8x1xf32>
      tpu.vector_store %arg4[%c0_27, %c0_28], %63 {strides = array<i32>} : memref<8x1xf32, #tpu.memory_space<vmem>>, vector<8x1xf32>,
    } else {
    }
    %c0_i32_23 = arith.constant 0 : i32
    %59 = arith.cmpi eq, %arg0, %c0_i32_23 : i32
    %60 = arith.extui %59 : i1 to i32
    %c0_i32_24 = arith.constant 0 : i32
    %61 = arith.cmpi ne, %60, %c0_i32_24 : i32
    scf.if %61 {
      %cst_25 = arith.constant 0.000000e+00 : f32
      %62 = vector.broadcast %cst_25 : f32 to vector<1x1x1xf32>
      %c0_26 = arith.constant 0 : index
      %c0_27 = arith.constant 0 : index
      %63 = vector.load %arg4[%c0_26, %c0_27] : memref<8x1xf32, #tpu.memory_space<vmem>>, vector<8x1xf32>
      %64 = vector.shape_cast %63 : vector<8x1xf32> to vector<1x8x1xf32>
      %cst_28 = arith.constant dense<0.000000e+00> : vector<1xf32>
      %65 = vector.multi_reduction <add>, %64, %cst_28 [1, 2] : vector<1x8x1xf32> to vector<1xf32>
      %66 = vector.shape_cast %65 : vector<1xf32> to vector<1x1x1xf32>
      %67 = vector.extract %66[0, 0, 0] : f32 from vector<1x1x1xf32>
      %68 = vector.broadcast %67 : f32 to vector<1x1x1xf32>
      %69 = arith.addf %62, %68 : vector<1x1x1xf32>
      %c0_29 = arith.constant 0 : index
      %c0_30 = arith.constant 0 : index
      %c0_31 = arith.constant 0 : index
      %70 = vector.load %arg3[%c0_29, %c0_30, %c0_31] : memref<1x1x1xf32, #tpu.memory_space<vmem>>, vector<1x1x1xf32>
      tpu.vector_store %arg3[%c0_29, %c0_30, %c0_31], %69 {strides = array<i32>} : memref<1x1x1xf32, #tpu.memory_space<vmem>>, vector<1x1x1xf32>,
    } else {
    }
    return
  }
  func.func @transform_0(%arg0: i32) -> (i32, i32) {
    %c0_i32 = arith.constant 0 : i32
    %c0_i32_0 = arith.constant 0 : i32
    return %arg0, %c0_i32 : i32, i32
  }
  func.func @transform_1(%arg0: i32) -> (i32, i32) {
    %c0_i32 = arith.constant 0 : i32
    %c0_i32_0 = arith.constant 0 : i32
    return %arg0, %c0_i32 : i32, i32
  }
  func.func @transform_2(%arg0: i32) -> (i32, i32, i32) {
    %c0_i32 = arith.constant 0 : i32
    %c0_i32_0 = arith.constant 0 : i32
    %c0_i32_1 = arith.constant 0 : i32
    %c0_i32_2 = arith.constant 0 : i32
    return %c0_i32, %c0_i32_0, %c0_i32_1 : i32, i32, i32
  }
}

</mosaic_0001>

<llo_original>
// kernel: tpu_custom_call.1
$region0: #{tpu_custom_call.1}
  #allocation0 [shape = 'u32[]', space=smem, size = 0x4, offset = 0x4, fixed_abs, tag = 'smem constant byte address 0x4 - core index']
  #allocation1 [shape = 'u32[72,128]{1,0:T(1,128)}', space=vmem, size = 0x9000, scoped, tag = 'internal scratch']
  #allocation2 [shape = 'f32[8,1]{1,0:T(8,128)}', space=vmem, size = 0x1000, scoped, tag = 'scratch operand']
  %s0 = inlined_call_operand.vmem [shape: f32[8,32], index: 0, kind: input, shape index: {}]
  %s1 = inlined_call_operand.vmem [shape: s32[8,1], index: 1, kind: input, shape index: {}]
  %s2 = inlined_call_operand.hbm [shape: f32[1,1,1], index: 2, kind: output, shape index: {}]
  %s3 = sld [smem:[#allocation0]]
  $region34: #{tpu_custom_call.1} parent=0
    _
  %s5 = ssub.s32 1, %s3
  %s6 = scalar_select 0, %s5, %s3
  $region1: #{tpu_custom_call.1} parent=0
    #allocation3 [shape = 'u8[512]{0}', space=vmem, size = 0x400, scoped, tag = 'output window, operand 0, single buffered']
    #allocation4 [shape = 's32[1]{0}', space=sflag, size = 0x4, scoped, tag = 'scoped memory for tpu_custom_call.1']
    %7 = vsyncpa [#allocation4], 0
    // Predicated region
    $region2: #{tpu_custom_call.1} parent=1 // pred_check
      _
    $region3: #{tpu_custom_call.1} parent=1 // pred_check_branch
      %9 = sbr.rel (0) target = $region5
    $region4: #{tpu_custom_call.1} parent=1 // pred_region
      _
    $region5: #{tpu_custom_call.1} parent=1 // pred_fallthru
      _
    // Predicated region
    $region6: #{tpu_custom_call.1} parent=1 // pred_check
      _
    $region7: #{tpu_custom_call.1} parent=1 // pred_check_branch
      %11 = sbr.rel (0) target = $region9
    $region8: #{tpu_custom_call.1} parent=1 // pred_region
      _
    $region9: #{tpu_custom_call.1} parent=1 // pred_fallthru
      _
    %p12 = scmp.eq.s32.totalorder 0, 0
    // Predicated region
    $region10: #{tpu_custom_call.1} parent=1 // pred_check
      %p13 = pneg %p12
    $region11: #{tpu_custom_call.1} parent=1 // pred_check_branch
      %15 = sbr.rel (%p13) target = $region13
    $region12: #{tpu_custom_call.1} parent=1 // pred_region
      %vm16 = vcmask 7168
      %17 = vst.msk [vmem:[#allocation2] sm:$0xff] %vm16, 0.0
    $region13: #{tpu_custom_call.1} parent=1 // pred_fallthru
      _
    %v18 = vld [vmem:[%s0] sm:$0xff]
    %v19 = vld [vmem:[%s1] sm:$0xff]
    %v20 = vshra.s32 %v19, 1
    %v21 = vand.u32 %v19, 1
    %vm22 = vcmp.gt.s32.totalorder %v21, 0
    %v23 = vsel %vm22, -1.0, 1.0
    %v24 = vsel %vm22, 1.25, 0.25
    %v25 = vsel %vm22, 0.75, 0.25
    %v26 = vmul.f32 %v23, 16.0
    %28 = vset.pattern.permute.xlu0 0
    %29 = vperm.xlu0 %28, %v26
    %v30 = vpop.permute.xlu0 %29
    %v32 = vmul.f32 %v18, %v30
    %v33 = vmul.f32 %v24, 16.0
    %35 = vset.pattern.permute.xlu0 0
    %36 = vperm.xlu0 %35, %v33
    %v37 = vpop.permute.xlu0 %36
    %v39 = vadd.f32 %v32, %v37
    %v40 = vmax.f32 %v39, 0.0
    %42 = vset.pattern.permute.xlu0 0
    %43 = vperm.xlu0 %42, %v25
    %v44 = vpop.permute.xlu0 %43
    %v46 = vsub.f32 %v18, %v44
    %v47 = vmul.f32 %v40, %v46
    %vm48 = vcmask 261120
    %v49 = vsel %vm48, %v47, -inf
    %50 = vmax.xlane.f32.xlu0 %v49
    %v51 = vpop.xlane.xlu0 %50
    %v52 = vsub.f32 %v47, %v51
    %v53 = vmul.f32 %v52, 1.442695
    %v54 = vpow.pop %v53
    %v55 = vsel %vm48, %v54, 0.0
    %56 = vadd.xlane.f32.xlu0 %v55
    %v57 = vpop.xlane.xlu0 %56
    %v58 = vlog2.pop %v57
    %v59 = vmul.f32 %v58, 0.6931472
    %v60 = vadd.f32 %v51, %v59
    %v61 = vlaneseq
    %v62 = vand.u32 %v61, 127
    %63 = vset.pattern.permute.xlu0 0
    %64 = vperm.xlu0 %63, %v20
    %v65 = vpop.permute.xlu0 %64
    %vm66 = vcmp.eq.s32.totalorder %v62, %v65
    %v67 = vsel %vm66, %v47, 0.0
    %v68 = vsel %vm48, %v67, 0.0
    %69 = vadd.xlane.f32.xlu0 %v68
    %v70 = vpop.xlane.xlu0 %69
    %v71 = vsub.f32 %v60, %v70
    %s72 = smul.u32 0, 8
    %s73 = sadd.s32 %s72, 8
    %p74 = scmp.gt.s32.totalorder %s73, 8
    // Predicated region
    $region14: #{tpu_custom_call.1} parent=1 // pred_check
      %p75 = pneg %p74
    $region15: #{tpu_custom_call.1} parent=1 // pred_check_branch
      %77 = sbr.rel (%p75) target = $region17
    $region16: #{tpu_custom_call.1} parent=1 // pred_region
      %v78 = vlaneseq
      %v79 = vshrl.u32 %v78, 7
      %v80 = vstv %s72
      %v81 = vadd.s32 %v80, %v79
      %v82 = vld [vmem:[#allocation2] sm:$0xff]
      %vm83 = vcmp.lt.s32.totalorder %v81, 8
      %v84 = vsel %vm83, %v71, 0.0
      %v85 = vadd.f32 %v82, %v84
      %vm86 = vcmask 7168
      %87 = vst.msk [vmem:[#allocation2] sm:$0xff] %vm86, %v85
    $region17: #{tpu_custom_call.1} parent=1 // pred_fallthru
      _
    %p88 = scmp.le.s32.totalorder %s73, 8
    // Predicated region
    $region18: #{tpu_custom_call.1} parent=1 // pred_check
      %p89 = pneg %p88
    $region19: #{tpu_custom_call.1} parent=1 // pred_check_branch
      %91 = sbr.rel (%p89) target = $region21
    $region20: #{tpu_custom_call.1} parent=1 // pred_region
      %v92 = vld [vmem:[#allocation2] sm:$0xff]
      %v93 = vadd.f32 %v92, %v71
      %vm94 = vcmask 7168
      %95 = vst.msk [vmem:[#allocation2] sm:$0xff] %vm94, %v93
    $region21: #{tpu_custom_call.1} parent=1 // pred_fallthru
      _
    // Predicated region
    $region22: #{tpu_custom_call.1} parent=1 // pred_check
      %p96 = pneg %p12
    $region23: #{tpu_custom_call.1} parent=1 // pred_check_branch
      %98 = sbr.rel (%p96) target = $region25
    $region24: #{tpu_custom_call.1} parent=1 // pred_region
      %v99 = vld [vmem:[#allocation2] sm:$0xff]
      %vm100 = vcmask 7168
      %v101 = vsel %vm100, %v99, 0.0
      %102 = vadd.xlane.f32.xlu0 %v101
      %v103 = vpop.xlane.xlu0 %102
      %v104 = vrot.slane %v103, 4
      %v105 = vadd.f32 %v103, %v104
      %v106 = vrot.slane %v105, 2
      %v107 = vadd.f32 %v105, %v106
      %v108 = vrot.slane %v107, 1
      %v109 = vadd.f32 %v107, %v108
      %s110 = vtos %v109
      %v111 = vstv %s110
      %v112 = vadd.f32 %v111, 0.0
      %vm113 = vcmask 0
      %114 = vst.msk [vmem:[#allocation3] sm:$0x1] %vm113, %v112
    $region25: #{tpu_custom_call.1} parent=1 // pred_fallthru
      _
    // Predicated region
    $region26: #{tpu_custom_call.1} parent=1 // pred_check
      _
    $region27: #{tpu_custom_call.1} parent=1 // pred_check_branch
      %116 = sbr.rel (0) target = $region29
    $region28: #{tpu_custom_call.1} parent=1 // pred_region
      %118 = vsyncadd [#allocation4], 0
      %s120 = sshll.u32 [#allocation3], 4
      %s121 = int_to_ptr.vmem [resolvable:$true] %s120
      %s122 = sshll.u32 %s2, 4
      %s123 = int_to_ptr.hbm [resolvable:$true] %s122
      %125 = dma.vmem_to_hbm [thread:$0]  %s121, 16, %s123, [#allocation4]
    $region29: #{tpu_custom_call.1} parent=1 // pred_fallthru
      _
    // Predicated region
    $region30: #{tpu_custom_call.1} parent=1 // pred_check
      _
    $region31: #{tpu_custom_call.1} parent=1 // pred_check_branch
      %127 = sbr.rel (0) target = $region33
    $region32: #{tpu_custom_call.1} parent=1 // pred_region
      %129 = dma.done [#allocation4], 16
    $region33: #{tpu_custom_call.1} parent=1 // pred_fallthru
      _
    %130 = vsyncpa [#allocation4], 1

</llo_original>
